<compile_context>
chip_gen: v5e
topology: v5e:2x2
jax: 0.10.0
libtpu: 0.0.40
codegen_flags: <defaults>
</compile_context>

<pallas_src>
import math

import jax
import jax.numpy as jnp
from jax import lax
from jax.experimental import pallas as pl
from jax.experimental.pallas import tpu as pltpu

# -(sys.maxsize + 1) == -2**63, applied in float32 exactly like the PyTorch
# masked_fill.  Python float -> jaxpr literal (not a captured constant).
_NEG_FILL = -9223372036854775808.0


# ---------------------------------------------------------------------------
# Conv1D:  y = x @ W + b, tiled over rows (M) and output columns (N).
# ---------------------------------------------------------------------------
def _matmul_bias_kernel(x_ref, w_ref, b_ref, o_ref):
    o_ref[...] = (
        jnp.dot(x_ref[...], w_ref[...], preferred_element_type=jnp.float32)
        + b_ref[...]
    )


def conv1d(x2d, w, b, *, tm=128, tn=128):
    """x2d: (M, K) f32, w: (K, N) f32, b: (1, N) f32  ->  (M, N) f32."""
    M, K = x2d.shape
    N = w.shape[1]
    if M % tm != 0:
        tm = M        # small-shape fallback: full first dim
    if N % tn != 0:
        tn = N        # small-shape fallback: full output width
    return pl.pallas_call(
        _matmul_bias_kernel,
        out_shape=jax.ShapeDtypeStruct((M, N), jnp.float32),
        grid_spec=pltpu.PrefetchScalarGridSpec(
            num_scalar_prefetch=0,
            grid=(M // tm, N // tn),
            in_specs=[
                pl.BlockSpec((tm, K), lambda i, j: (i, 0)),   # activation rows
                pl.BlockSpec((K, tn), lambda i, j: (0, j)),   # weight column tile
                pl.BlockSpec((1, tn), lambda i, j: (0, j)),   # bias column tile
            ],
            out_specs=pl.BlockSpec((tm, tn), lambda i, j: (i, j)),
        ),
        compiler_params=pltpu.CompilerParams(
            dimension_semantics=("parallel", "parallel")),
    )(x2d, w, b)


# ---------------------------------------------------------------------------
# Attention core: one (batch, head, query-tile) per grid step.
# ---------------------------------------------------------------------------
def _make_attention_kernel(d_k):
    inv_sqrt_dk = 1.0 / math.sqrt(d_k)   # Python float -> jaxpr literal

    def kernel(q_ref, k_ref, v_ref, mask_ref, blended_ref, scores_ref):
        q = q_ref[...]                 # (TQ, d_k)
        k = k_ref[...]                 # (S,  d_k)
        v = v_ref[...]                 # (S,  d_k)
        m = mask_ref[...]              # (1,  S)

        # QK^T contracting on d_k directly — no materialized transpose of k.
        s = lax.dot_general(q, k, (((1,), (1,)), ((), ())),
                            preferred_element_type=jnp.float32)      # (TQ, S)

        # PyTorch semantics: am = 1 - mask; am.masked_fill(am == 1, -2**63).
        # Built once per step from a single (1, S) row and broadcast-added.
        add_mask = 1.0 - m
        add_mask = jnp.where(add_mask == 1.0, _NEG_FILL, add_mask)    # (1, S)
        s = s * inv_sqrt_dk + add_mask

        # Numerically stable softmax; one reciprocal per row, then multiply
        # (avoids a (TQ, S)-wide divide on the VALU).
        s_max = jnp.max(s, axis=-1, keepdims=True)
        e = jnp.exp(s - s_max)
        inv_denom = pl.reciprocal(jnp.sum(e, axis=-1, keepdims=True))
        p = e * inv_denom                                             # (TQ, S)

        scores_ref[...] = p
        blended_ref[...] = jnp.dot(p, v, preferred_element_type=jnp.float32)

    return kernel


def attention_forward(x, attention_mask, wk, bk, wo, bo, num_heads):
    """x: (B,S,E) f32, attention_mask: (B,1,1,S) f32 (0/1), wk:(E,3E), bk:(1,3E),
    wo:(E,E), bo:(1,E).  Returns (blended (B,S,E), attention_scores (B,H,S,S))."""
    B, S, E = x.shape
    H = num_heads
    d_k = E // H

    # ---- 1. QKV projection (Conv1D wk) as a dedicated tiled matmul ---------
    qkv = conv1d(x.reshape(B * S, E), wk, bk)              # (B*S, 3E)

    # Split q/k/v and heads (wrapper-level layout plumbing only).
    qkv = qkv.reshape(B, S, 3, H, d_k)
    qkv = jnp.transpose(qkv, (2, 0, 3, 1, 4))              # (3, B, H, S, d_k)
    q, k, v = qkv[0], qkv[1], qkv[2]

    # ---- 2. Attention core, grid over (batch, head, query tile) ------------
    tq = 128 if (S % 128 == 0) else S
    grid = (B, H, S // tq)

    blended_heads, scores = pl.pallas_call(
        _make_attention_kernel(d_k),
        out_shape=(
            jax.ShapeDtypeStruct((B, H, S, d_k), jnp.float32),
            jax.ShapeDtypeStruct((B, H, S, S), jnp.float32),
        ),
        grid_spec=pltpu.PrefetchScalarGridSpec(
            num_scalar_prefetch=0,
            grid=grid,
            in_specs=[
                # q: one query tile per step
                pl.BlockSpec((None, None, tq, d_k), lambda b, h, qt: (b, h, qt, 0)),
                # k, v: full key range; invariant along qt (innermost) -> no re-DMA
                pl.BlockSpec((None, None, S, d_k), lambda b, h, qt: (b, h, 0, 0)),
                pl.BlockSpec((None, None, S, d_k), lambda b, h, qt: (b, h, 0, 0)),
                # mask: one (1, S) row per batch
                pl.BlockSpec((None, None, 1, S), lambda b, h, qt: (b, 0, 0, 0)),
            ],
            out_specs=[
                pl.BlockSpec((None, None, tq, d_k), lambda b, h, qt: (b, h, qt, 0)),
                pl.BlockSpec((None, None, tq, S), lambda b, h, qt: (b, h, qt, 0)),
            ],
        ),
        compiler_params=pltpu.CompilerParams(
            dimension_semantics=("parallel", "parallel", "parallel")),
    )(q, k, v, attention_mask)

    # ---- 3. Merge heads + output projection (Conv1D wo) --------------------
    # TODO(synk): writing head outputs directly into the merged (B,S,E) layout
    # would need a d_k-wide lane block (not 128-aligned); kept as wrapper transpose.
    blended = jnp.transpose(blended_heads, (0, 2, 1, 3)).reshape(B * S, E)
    out = conv1d(blended, wo, bo).reshape(B, S, E)
    return out, scores


def reference_forward(x, attention_mask, wk, bk, wo, bo, num_heads):
    """Pure-JAX reference mirroring the PyTorch module, for validation."""
    B, S, E = x.shape
    H = num_heads
    d_k = E // H
    qkv = x @ wk + bk[0]                                    # (B, S, 3E)
    q, k, v = jnp.split(qkv, 3, axis=-1)

    def split_heads(t):
        return t.reshape(B, S, H, d_k).transpose(0, 2, 1, 3)  # (B, H, S, d_k)

    Q, K, V = split_heads(q), split_heads(k), split_heads(v)
    r = jnp.einsum("bhqd,bhkd->bhqk", Q, K) / math.sqrt(d_k)
    am = 1.0 - attention_mask
    am = jnp.where(am == 1.0, _NEG_FILL, am)
    r = r + am
    scores = jax.nn.softmax(r, axis=-1)
    blended = jnp.einsum("bhqk,bhkd->bhqd", scores, V)
    blended = blended.transpose(0, 2, 1, 3).reshape(B, S, E)
    return blended @ wo + bo[0], scores


if __name__ == "__main__":
    # small shapes consistent with the module: d_embed == d_model (GPT-2 convention)
    B, S = 2, 8
    d_embed = d_model = 32
    num_heads = 4

    key = jax.random.PRNGKey(0)
    k_x, k_wk, k_wo = jax.random.split(key, 3)

    x = jax.random.normal(k_x, (B, S, d_embed), dtype=jnp.float32)

    # attention_mask: 1 = attend, 0 = masked; batch 1 masks the last two key positions
    mask = jnp.ones((B, 1, 1, S), dtype=jnp.float32)
    mask = mask.at[1, 0, 0, S - 2:].set(0.0)

    # deterministic parameter init (matches __init__: normal(std=0.02), zero bias)
    wk = 0.02 * jax.random.normal(k_wk, (d_embed, 3 * d_embed), dtype=jnp.float32)
    bk = jnp.zeros((1, 3 * d_embed), dtype=jnp.float32)
    wo = 0.02 * jax.random.normal(k_wo, (d_embed, d_embed), dtype=jnp.float32)
    bo = jnp.zeros((1, d_embed), dtype=jnp.float32)

    out, scores = attention_forward(x, mask, wk, bk, wo, bo, num_heads)
    out = jax.block_until_ready(out)
    scores = jax.block_until_ready(scores)

    ref_out, ref_scores = reference_forward(x, mask, wk, bk, wo, bo, num_heads)
    assert out.shape == (B, S, d_model)
    assert scores.shape == (B, num_heads, S, S)
    assert jnp.allclose(out, ref_out, atol=1e-5, rtol=1e-5)
    assert jnp.allclose(scores, ref_scores, atol=1e-5, rtol=1e-5)

    print("KERNEL_OK")
</pallas_src>

<mosaic_0001>
module attributes {stable_mosaic.version = 11 : i64} {
  func.func @_matmul_bias_kernel(%arg0: i32, %arg1: i32, %arg2: memref<16x32xf32, #tpu.memory_space<vmem>>, %arg3: memref<32x96xf32, #tpu.memory_space<vmem>>, %arg4: memref<1x96xf32, #tpu.memory_space<vmem>>, %arg5: memref<16x96xf32, #tpu.memory_space<vmem>>) attributes {dimension_semantics = [#tpu.dimension_semantics<parallel>, #tpu.dimension_semantics<parallel>], iteration_bounds = array<i64: 1, 1>, scalar_prefetch = 0 : i64, scratch_operands = 0 : i64, tpu.core_type = #tpu.core_type<tc>, window_params = [{transform_indices = @transform_0, window_bounds = array<i64: 16, 32>}, {transform_indices = @transform_1, window_bounds = array<i64: 32, 96>}, {transform_indices = @transform_2, window_bounds = array<i64: 1, 96>}, {transform_indices = @transform_3, window_bounds = array<i64: 16, 96>}]} {
    %c0 = arith.constant 0 : index
    %c0_0 = arith.constant 0 : index
    %0 = vector.load %arg2[%c0, %c0_0] : memref<16x32xf32, #tpu.memory_space<vmem>>, vector<16x32xf32>
    %c0_1 = arith.constant 0 : index
    %c0_2 = arith.constant 0 : index
    %1 = vector.load %arg3[%c0_1, %c0_2] : memref<32x96xf32, #tpu.memory_space<vmem>>, vector<32x96xf32>
    %cst = arith.constant dense<0.000000e+00> : vector<16x96xf32>
    %2 = tpu.matmul %0, %1, %cst {dimension_numbers = #tpu.dot_dimension_numbers<[1], [0], [0], [1], [0, 0, 1, 1], [], []>} : vector<16x32xf32>, vector<32x96xf32>, vector<16x96xf32> -> vector<16x96xf32>
    %c0_3 = arith.constant 0 : index
    %c0_4 = arith.constant 0 : index
    %3 = vector.load %arg4[%c0_3, %c0_4] : memref<1x96xf32, #tpu.memory_space<vmem>>, vector<1x96xf32>
    %4 = vector.broadcast %3 : vector<1x96xf32> to vector<16x96xf32>
    %5 = arith.addf %2, %4 : vector<16x96xf32>
    %c0_5 = arith.constant 0 : index
    %c0_6 = arith.constant 0 : index
    %6 = vector.load %arg5[%c0_5, %c0_6] : memref<16x96xf32, #tpu.memory_space<vmem>>, vector<16x96xf32>
    tpu.vector_store %arg5[%c0_5, %c0_6], %5 {strides = array<i32>} : memref<16x96xf32, #tpu.memory_space<vmem>>, vector<16x96xf32>,
    return
  }
  func.func @transform_0(%arg0: i32, %arg1: i32) -> (i32, i32) {
    %c0_i32 = arith.constant 0 : i32
    %c0_i32_0 = arith.constant 0 : i32
    return %arg0, %c0_i32 : i32, i32
  }
  func.func @transform_1(%arg0: i32, %arg1: i32) -> (i32, i32) {
    %c0_i32 = arith.constant 0 : i32
    %c0_i32_0 = arith.constant 0 : i32
    return %c0_i32, %arg1 : i32, i32
  }
  func.func @transform_2(%arg0: i32, %arg1: i32) -> (i32, i32) {
    %c0_i32 = arith.constant 0 : i32
    %c0_i32_0 = arith.constant 0 : i32
    return %c0_i32, %arg1 : i32, i32
  }
  func.func @transform_3(%arg0: i32, %arg1: i32) -> (i32, i32) {
    %c0_i32 = arith.constant 0 : i32
    return %arg0, %arg1 : i32, i32
  }
}

</mosaic_0001>

<llo_original>
// kernel: tpu_custom_call.1
$region0: #{tpu_custom_call.1}
  #allocation0 [shape = 'u32[]', space=smem, size = 0x4, offset = 0x4, fixed_abs, tag = 'smem constant byte address 0x4 - core index']
  #allocation1 [shape = 'u32[72,128]{1,0:T(1,128)}', space=vmem, size = 0x9000, scoped, tag = 'internal scratch']
  %s0 = inlined_call_operand.hbm [shape: f32[16,32], index: 0, kind: input, shape index: {}]
  %s1 = inlined_call_operand.hbm [shape: f32[32,96], index: 1, kind: input, shape index: {}]
  %s2 = inlined_call_operand.vmem [shape: f32[1,96], index: 2, kind: input, shape index: {}]
  %s3 = inlined_call_operand.hbm [shape: f32[16,96], index: 3, kind: output, shape index: {}]
  %s4 = sld [smem:[#allocation0]]
  $region30: #{tpu_custom_call.1} parent=0
    _
  %s6 = ssub.s32 1, %s4
  %s7 = scalar_select 0, %s6, %s4
  $region1: #{tpu_custom_call.1} parent=0
    #allocation2 [shape = 'u8[8192]{0}', space=vmem, size = 0x2000, scoped, tag = 'input window, operand 0, single buffered']
    #allocation3 [shape = 's32[1]{0}', space=sflag, size = 0x4, scoped, tag = 'scoped memory for tpu_custom_call.1']
    #allocation4 [shape = 's32[1]{0}', space=sflag, size = 0x4, scoped, tag = 'scoped memory for tpu_custom_call.1']
    #allocation5 [shape = 'u8[16384]{0}', space=vmem, size = 0x4000, scoped, tag = 'input window, operand 1, single buffered']
    #allocation6 [shape = 's32[1]{0}', space=sflag, size = 0x4, scoped, tag = 'scoped memory for tpu_custom_call.1']
    #allocation7 [shape = 'u8[8192]{0}', space=vmem, size = 0x2000, scoped, tag = 'output window, operand 0, single buffered']
    %8 = vsyncpa [#allocation3], 0
    %9 = vsyncpa [#allocation6], 0
    %10 = vsyncpa [#allocation4], 0
    // Predicated region
    $region2: #{tpu_custom_call.1} parent=1 // pred_check
      _
    $region3: #{tpu_custom_call.1} parent=1 // pred_check_branch
      %12 = sbr.rel (0) target = $region5
    $region4: #{tpu_custom_call.1} parent=1 // pred_region
      %14 = vsyncadd [#allocation3], 0
      %s15 = sshll.u32 %s0, 4
      %s16 = int_to_ptr.hbm [resolvable:$true] %s15
      %s17 = sshll.u32 [#allocation2], 4
      %s18 = int_to_ptr.vmem [resolvable:$true] %s17
      %23 = dma.hbm_to_vmem [thread:$0]  %s16, 256, %s18, [#allocation3], 128, 128, 8
    $region5: #{tpu_custom_call.1} parent=1 // pred_fallthru
      _
    // Predicated region
    $region6: #{tpu_custom_call.1} parent=1 // pred_check
      _
    $region7: #{tpu_custom_call.1} parent=1 // pred_check_branch
      %25 = sbr.rel (0) target = $region9
    $region8: #{tpu_custom_call.1} parent=1 // pred_region
      %27 = vsyncadd [#allocation6], 0
      %s28 = sshll.u32 %s1, 4
      %s29 = int_to_ptr.hbm [resolvable:$true] %s28
      %s30 = sshll.u32 [#allocation5], 4
      %s31 = int_to_ptr.vmem [resolvable:$true] %s30
      %36 = dma.hbm_to_vmem [thread:$0]  %s29, 512, %s31, [#allocation6], 128, 128, 8
    $region9: #{tpu_custom_call.1} parent=1 // pred_fallthru
      _
    // Predicated region
    $region10: #{tpu_custom_call.1} parent=1 // pred_check
      _
    $region11: #{tpu_custom_call.1} parent=1 // pred_check_branch
      %38 = sbr.rel (0) target = $region13
    $region12: #{tpu_custom_call.1} parent=1 // pred_region
      _
    $region13: #{tpu_custom_call.1} parent=1 // pred_fallthru
      _
    // Predicated region
    $region14: #{tpu_custom_call.1} parent=1 // pred_check
      _
    $region15: #{tpu_custom_call.1} parent=1 // pred_check_branch
      %40 = sbr.rel (0) target = $region17
    $region16: #{tpu_custom_call.1} parent=1 // pred_region
      %42 = dma.done [#allocation3], 256
    $region17: #{tpu_custom_call.1} parent=1 // pred_fallthru
      _
    // Predicated region
    $region18: #{tpu_custom_call.1} parent=1 // pred_check
      _
    $region19: #{tpu_custom_call.1} parent=1 // pred_check_branch
      %44 = sbr.rel (0) target = $region21
    $region20: #{tpu_custom_call.1} parent=1 // pred_region
      %46 = dma.done [#allocation6], 512
    $region21: #{tpu_custom_call.1} parent=1 // pred_fallthru
      _
    %v47 = vld [vmem:[#allocation2] sm:$0xff]
    %v48 = vld [vmem:[#allocation2 + $0x8] sm:$0xff]
    %v49 = vld [vmem:[#allocation5] sm:$0xff]
    %v50 = vld [vmem:[#allocation5 + $0x8] sm:$0xff]
    %v51 = vld [vmem:[#allocation5 + $0x10] sm:$0xff]
    %v52 = vld [vmem:[#allocation5 + $0x18] sm:$0xff]
    %v53 = vld [vmem:[%s2] sm:$0x1]
    %v55 = vperm.slane %v53, 0
    %vm57 = vcmask 261120
    %v59 = vsel %vm57, %v47, 0
    %v62 = vsel %vm57, %v48, 0
    %64 = vmatpush.msra.mxu0 0.0
    %65 = vmatpush.msra.mxu0 0.0
    %66 = vmatpush.msra.mxu0 0.0
    %67 = vmatpush.msra.mxu0 0.0
    %68 = vmatpush.msra.mxu0 0.0
    %69 = vmatpush.msra.mxu0 0.0
    %70 = vmatpush.msra.mxu0 0.0
    %71 = vmatpush.msra.mxu0 0.0
    %72 = vmatpush.msra.mxu0 0.0
    %73 = vmatpush.msra.mxu0 0.0
    %74 = vmatpush.msra.mxu0 0.0
    %75 = vmatpush.msra.mxu0 0.0
    %76 = vmatpush.msra.mxu0 %v52
    %77 = vmatpush.msra.mxu0 %v51
    %78 = vmatpush.msra.mxu0 %v50
    %79 = vmatpush.msra.mxu0 %v49
    %80 = vmatmul.f32.gmra.mxu0 %v59
    %v81 = vpop.f32.mrf.mxu0
    %v82 = vadd.f32 %v55, %v81
    %83 = vmatmul.f32.gmra.mxu0 %v62
    %v84 = vpop.f32.mrf.mxu0
    %v85 = vadd.f32 %v55, %v84
    %86 = vdwg.mxu0
    %vm87 = vcmask 785408
    %88 = vst.msk [vmem:[#allocation7] sm:$0xff] %vm87, %v82
    %89 = vst.msk [vmem:[#allocation7 + $0x8] sm:$0xff] %vm87, %v85
    // Predicated region
    $region22: #{tpu_custom_call.1} parent=1 // pred_check
      _
    $region23: #{tpu_custom_call.1} parent=1 // pred_check_branch
      %91 = sbr.rel (0) target = $region25
    $region24: #{tpu_custom_call.1} parent=1 // pred_region
      %93 = vsyncadd [#allocation4], 0
      %s94 = sshll.u32 [#allocation7], 4
      %s95 = int_to_ptr.vmem [resolvable:$true] %s94
      %s96 = sshll.u32 %s3, 4
      %s97 = int_to_ptr.hbm [resolvable:$true] %s96
      %102 = dma.vmem_to_hbm [thread:$0]  %s95, 256, %s97, [#allocation4], 128, 128, 8
    $region25: #{tpu_custom_call.1} parent=1 // pred_fallthru
      _
    // Predicated region
    $region26: #{tpu_custom_call.1} parent=1 // pred_check
      _
    $region27: #{tpu_custom_call.1} parent=1 // pred_check_branch
      %104 = sbr.rel (0) target = $region29
    $region28: #{tpu_custom_call.1} parent=1 // pred_region
      %106 = dma.done [#allocation4], 256
    $region29: #{tpu_custom_call.1} parent=1 // pred_fallthru
      _
    %107 = vsyncpa [#allocation3], 1
    %108 = vsyncpa [#allocation6], 1
    %109 = vsyncpa [#allocation4], 1

</llo_original>
